<compile_context>
chip_gen: v5e
topology: v5e:2x2
jax: 0.10.0
libtpu: 0.0.40
codegen_flags: <defaults>
</compile_context>

<pallas_src>
import jax
import jax.numpy as jnp
from jax.experimental import pallas as pl
from jax.experimental.pallas import tpu as pltpu


def _convt_stats_kernel(p_ref, w_ref, s_ref, q_ref):
    # p_ref: (TM, Kp) bf16 patches, w_ref: (Kp, NC) bf16 rearranged kernel.
    # s_ref / q_ref: (1, 1, NC) f32 per-tile partial sum / sum-of-squares.
    # Stats-only: the (TM, NC) f32 matmul value never leaves the core.
    z = jnp.dot(p_ref[...], w_ref[...], preferred_element_type=jnp.float32)
    s_ref[...] = jnp.sum(z, axis=0, keepdims=True)[None]
    q_ref[...] = jnp.sum(z * z, axis=0, keepdims=True)[None]


def _convt_bn_lrelu_kernel(p_ref, w_ref, scale_ref, shift_ref, o_ref):
    # Recompute the matmul (cheap vs. re-reading a stored Z on a mem-bound kernel),
    # fuse BN affine + LeakyReLU(0.1) (module spec fixes negative_slope=0.1), and
    # store the final sub-pixel output once in bf16 (lane-dense columns).
    z = jnp.dot(p_ref[...], w_ref[...], preferred_element_type=jnp.float32)
    y = z * scale_ref[...] + shift_ref[...]
    o_ref[...] = jnp.where(y >= 0.0, y, 0.1 * y).astype(o_ref.dtype)


def _round_up(v, m):
    return ((v + m - 1) // m) * m


def _tile_and_vmem(m, kp, nc):
    """Pick the M-tile and a VMEM limit from the actual tile sizes.

    Mem-bound regime: use the biggest tile that (a) fits comfortably in this chip's
    VMEM with double-buffering and (b) keeps >= 2 grid steps so both v7x TensorCores
    get work via the "parallel" grid axis.
    """
    try:
        info = pltpu.get_tpu_info()
        cap = getattr(info, "vmem_capacity_bytes", 64 * 1024 * 1024)
    except Exception:  # conservative fallback (v7x-sized VMEM)
        cap = 64 * 1024 * 1024
    budget = int(cap * 0.7)

    def per_step_bytes(tm):
        # double-buffered patches + (worst case double-buffered) weight block
        # + double-buffered bf16 output tile + f32 matmul value held in vregs/VMEM.
        return (2 * tm * kp * 2 + 2 * kp * nc * 2 + 2 * tm * nc * 2
                + tm * nc * 4)

    chosen = None
    for tm in (1024, 512, 256, 128, 64, 32, 16, 8):
        if per_step_bytes(tm) <= budget and pl.cdiv(m, tm) >= 2:
            chosen = tm
            break
    if chosen is None:  # tiny problem, or weight block alone is huge
        for tm in (1024, 512, 256, 128, 64, 32, 16, 8):
            if per_step_bytes(tm) <= budget:
                chosen = tm
                break
    if chosen is None:
        chosen = 8  # see TODO(synk) about adding a K grid axis for huge Cin*Cout
    vmem_limit = max(32 * 1024 * 1024,
                     min(int(per_step_bytes(chosen) * 1.5) + (4 << 20), budget))
    return chosen, vmem_limit


def conv_trans_block_forward(x, weight, bias, gamma, beta, *, eps=1e-5):
    """x: (N, Cin, H, W).  weight: (Cin, Cout, 4, 4) (torch ConvTranspose2d layout).
    Returns NCHW f32 output of shape (N, Cout, 2H, 2W)."""
    n, cin, h, w = x.shape
    cout = weight.shape[1]
    kdim = cin * 9
    m = n * h * w

    kp = _round_up(kdim, 128)          # lane/MXU-aligned contraction dim
    nc = _round_up(4 * cout, 128)      # lane-dense output columns (co, ph, pw)
    tm, vmem_limit = _tile_and_vmem(m, kp, nc)
    mp = _round_up(m, tm)
    g = mp // tm

    # ---- im2col of the 1-padded input (bf16 end to end): 3x3 stride-1 windows ----
    # TODO(synk): fuse this gather into the passes to cut the 9x patch HBM traffic.
    xb = x.astype(jnp.bfloat16)
    xp = jnp.pad(xb, ((0, 0), (0, 0), (1, 1), (1, 1)))
    taps = [xp[:, :, i:i + h, j:j + w] for i in range(3) for j in range(3)]
    patches = jnp.stack(taps, axis=0)                     # (9, N, Cin, H, W)
    patches = jnp.transpose(patches, (1, 3, 4, 2, 0))     # (N, H, W, Cin, 9)
    patches = patches.reshape(m, kdim)
    patches = jnp.pad(patches, ((0, mp - m), (0, kp - kdim)))

    # ---- rearrange the transposed-conv kernel into the (Cin*9, Cout*4) matmul ----
    # Output sub-pixel (ph, pw) at (2a+ph, 2b+pw) uses input x[a-1+i, b-1+j] with
    # kernel tap (3 - ph - 2*i2, 3 - pw - 2*j2), where i = ph + i2, j = pw + j2.
    wbig = jnp.zeros((cin, 3, 3, cout, 2, 2), jnp.float32)
    for ph in range(2):
        for pw in range(2):
            for i2 in range(2):
                for j2 in range(2):
                    wbig = wbig.at[:, ph + i2, pw + j2, :, ph, pw].set(
                        weight[:, :, 3 - ph - 2 * i2, 3 - pw - 2 * j2])
    wbig = wbig.reshape(kdim, 4 * cout)
    wbig = jnp.pad(wbig, ((0, kp - kdim), (0, nc - 4 * cout))).astype(jnp.bfloat16)

    compiler_params = pltpu.CompilerParams(
        dimension_semantics=("parallel",), vmem_limit_bytes=vmem_limit)

    # ---- pass 1: stats-only tiled MXU matmul (per-tile BN partials, no Z store) ----
    psum, psq = pl.pallas_call(
        _convt_stats_kernel,
        out_shape=(jax.ShapeDtypeStruct((g, 1, nc), jnp.float32),
                   jax.ShapeDtypeStruct((g, 1, nc), jnp.float32)),
        grid=(g,),
        in_specs=[pl.BlockSpec((tm, kp), lambda i: (i, 0)),
                  pl.BlockSpec((kp, nc), lambda i: (0, 0))],
        out_specs=(pl.BlockSpec((1, 1, nc), lambda i: (i, 0, 0)),
                   pl.BlockSpec((1, 1, nc), lambda i: (i, 0, 0))),
        compiler_params=compiler_params,
        cost_estimate=pl.CostEstimate(
            flops=2 * mp * kp * nc, transcendentals=0,
            bytes_accessed=mp * kp * 2 + kp * nc * 2 + 2 * g * nc * 4),
    )(patches, wbig)

    # ---- tiny f32 epilogue: batch statistics -> per-column scale / shift ----
    col_sum = jnp.sum(psum[:, 0, :], axis=0)[:4 * cout].reshape(cout, 4)
    col_sq = jnp.sum(psq[:, 0, :], axis=0)[:4 * cout].reshape(cout, 4)
    count = jnp.float32(m * 4)                      # = N * 2H * 2W per channel
    mean = jnp.sum(col_sum, axis=1) / count         # mean of the bias-free conv
    # One-pass E[z^2] - E[z]^2 in f32 (fine for conv activations; switch to a shifted
    # two-pass formula if exact torch-BN parity is needed when |mean| >> std).
    var = jnp.maximum(jnp.sum(col_sq, axis=1) / count - mean * mean, 0.0)
    inv_std = jax.lax.rsqrt(var + eps)
    scale = gamma.astype(jnp.float32) * inv_std
    # BN subtracts the batch mean, so the ConvTranspose bias cancels exactly:
    # ((conv + b) - (mean + b)) * scale + beta == conv*scale + (beta - mean*scale).
    shift = beta.astype(jnp.float32) - mean * scale
    scale_cols = jnp.zeros((1, nc), jnp.float32).at[0, :4 * cout].set(
        jnp.repeat(scale, 4))
    shift_cols = jnp.zeros((1, nc), jnp.float32).at[0, :4 * cout].set(
        jnp.repeat(shift, 4))

    # ---- pass 2: recompute matmul + fused BN affine + LeakyReLU, bf16 store ----
    out = pl.pallas_call(
        _convt_bn_lrelu_kernel,
        out_shape=jax.ShapeDtypeStruct((mp, nc), jnp.bfloat16),
        grid=(g,),
        in_specs=[pl.BlockSpec((tm, kp), lambda i: (i, 0)),
                  pl.BlockSpec((kp, nc), lambda i: (0, 0)),
                  pl.BlockSpec((1, nc), lambda i: (0, 0)),
                  pl.BlockSpec((1, nc), lambda i: (0, 0))],
        out_specs=pl.BlockSpec((tm, nc), lambda i: (i, 0)),
        compiler_params=compiler_params,
        cost_estimate=pl.CostEstimate(
            flops=2 * mp * kp * nc + 4 * mp * nc, transcendentals=0,
            bytes_accessed=mp * kp * 2 + kp * nc * 2 + 2 * nc * 4 + mp * nc * 2),
    )(patches, wbig, scale_cols, shift_cols)

    # ---- pixel shuffle: (n, a, b, co, ph, pw) -> NCHW, single boundary transpose ----
    y = out[:m, :4 * cout].astype(jnp.float32).reshape(n, h, w, cout, 2, 2)
    y = jnp.transpose(y, (0, 3, 1, 4, 2, 5)).reshape(n, cout, 2 * h, 2 * w)
    return y


if __name__ == "__main__":
    key = jax.random.PRNGKey(0)
    kx, kw_, kb = jax.random.split(key, 3)

    N, Cin, H, W = 2, 4, 16, 16
    Cout = 8

    x = jax.random.normal(kx, (N, Cin, H, W), dtype=jnp.float32)

    # torch ConvTranspose2d weight layout: (in_channels, out_channels, kH, kW)
    bound = 1.0 / ((Cout * 4 * 4) ** 0.5)
    weight = jax.random.uniform(kw_, (Cin, Cout, 4, 4), minval=-bound, maxval=bound,
                                dtype=jnp.float32)
    bias = jax.random.uniform(kb, (Cout,), minval=-bound, maxval=bound,
                              dtype=jnp.float32)
    gamma = jnp.ones((Cout,), jnp.float32)   # BatchNorm2d default weight
    beta = jnp.zeros((Cout,), jnp.float32)   # BatchNorm2d default bias

    fwd = jax.jit(conv_trans_block_forward)
    y = fwd(x, weight, bias, gamma, beta)
    jax.block_until_ready(y)
    assert y.shape == (N, Cout, 2 * H, 2 * W), y.shape

    # Pure-JAX reference: ConvTranspose2d == lhs-dilated conv with the flipped kernel.
    w_conv = jnp.transpose(jnp.flip(weight, axis=(2, 3)), (1, 0, 2, 3))
    conv = jax.lax.conv_general_dilated(
        x.astype(jnp.bfloat16), w_conv.astype(jnp.bfloat16),
        window_strides=(1, 1), padding=((2, 2), (2, 2)),
        lhs_dilation=(2, 2), rhs_dilation=(1, 1),
        dimension_numbers=("NCHW", "OIHW", "NCHW"),
        preferred_element_type=jnp.float32)
    conv = conv + bias[None, :, None, None]
    mu = conv.mean(axis=(0, 2, 3), keepdims=True)
    var = jnp.mean((conv - mu) ** 2, axis=(0, 2, 3), keepdims=True)
    ref = (conv - mu) * jax.lax.rsqrt(var + 1e-5)
    ref = ref * gamma[None, :, None, None] + beta[None, :, None, None]
    ref = jnp.where(ref >= 0, ref, 0.1 * ref)

    # Tolerance covers bf16 matmul inputs on both sides plus the kernel's bf16 store
    # of the BN-normalized (O(1)-magnitude) output.
    err = float(jnp.max(jnp.abs(y - ref)))
    assert err < 7.5e-2, f"max |kernel - reference| = {err}"
    print("KERNEL_OK")
</pallas_src>

<mosaic_0001>
module attributes {stable_mosaic.version = 11 : i64} {
  func.func @_convt_stats_kernel(%arg0: i32, %arg1: memref<256x128xbf16, #tpu.memory_space<vmem>>, %arg2: memref<128x128xbf16, #tpu.memory_space<vmem>>, %arg3: memref<1x1x128xf32, #tpu.memory_space<vmem>>, %arg4: memref<1x1x128xf32, #tpu.memory_space<vmem>>) attributes {dimension_semantics = [#tpu.dimension_semantics<parallel>], iteration_bounds = array<i64: 2>, scalar_prefetch = 0 : i64, scratch_operands = 0 : i64, tpu.core_type = #tpu.core_type<tc>, window_params = [{transform_indices = @transform_0, window_bounds = array<i64: 256, 128>}, {pipeline_mode = #tpu.pipeline_mode<synchronous>, transform_indices = @transform_1, window_bounds = array<i64: 128, 128>}, {transform_indices = @transform_2, window_bounds = array<i64: 1, 1, 128>}, {transform_indices = @transform_3, window_bounds = array<i64: 1, 1, 128>}]} {
    %c0 = arith.constant 0 : index
    %c0_0 = arith.constant 0 : index
    %0 = vector.load %arg1[%c0, %c0_0] : memref<256x128xbf16, #tpu.memory_space<vmem>>, vector<256x128xbf16>
    %c0_1 = arith.constant 0 : index
    %c0_2 = arith.constant 0 : index
    %1 = vector.load %arg2[%c0_1, %c0_2] : memref<128x128xbf16, #tpu.memory_space<vmem>>, vector<128x128xbf16>
    %cst = arith.constant dense<0.000000e+00> : vector<256x128xf32>
    %2 = tpu.matmul %0, %1, %cst {dimension_numbers = #tpu.dot_dimension_numbers<[1], [0], [0], [1], [0, 0, 1, 1], [], []>} : vector<256x128xbf16>, vector<128x128xbf16>, vector<256x128xf32> -> vector<256x128xf32>
    %cst_3 = arith.constant dense<0.000000e+00> : vector<128xf32>
    %3 = vector.multi_reduction <add>, %2, %cst_3 [0] : vector<256x128xf32> to vector<128xf32>
    %4 = vector.shape_cast %3 : vector<128xf32> to vector<1x128xf32>
    %5 = vector.shape_cast %4 : vector<1x128xf32> to vector<1x1x128xf32>
    %c0_4 = arith.constant 0 : index
    %c0_5 = arith.constant 0 : index
    %c0_6 = arith.constant 0 : index
    %6 = vector.load %arg3[%c0_4, %c0_5, %c0_6] : memref<1x1x128xf32, #tpu.memory_space<vmem>>, vector<1x1x128xf32>
    tpu.vector_store %arg3[%c0_4, %c0_5, %c0_6], %5 {strides = array<i32>} : memref<1x1x128xf32, #tpu.memory_space<vmem>>, vector<1x1x128xf32>,
    %7 = arith.mulf %2, %2 : vector<256x128xf32>
    %cst_7 = arith.constant dense<0.000000e+00> : vector<128xf32>
    %8 = vector.multi_reduction <add>, %7, %cst_7 [0] : vector<256x128xf32> to vector<128xf32>
    %9 = vector.shape_cast %8 : vector<128xf32> to vector<1x128xf32>
    %10 = vector.shape_cast %9 : vector<1x128xf32> to vector<1x1x128xf32>
    %c0_8 = arith.constant 0 : index
    %c0_9 = arith.constant 0 : index
    %c0_10 = arith.constant 0 : index
    %11 = vector.load %arg4[%c0_8, %c0_9, %c0_10] : memref<1x1x128xf32, #tpu.memory_space<vmem>>, vector<1x1x128xf32>
    tpu.vector_store %arg4[%c0_8, %c0_9, %c0_10], %10 {strides = array<i32>} : memref<1x1x128xf32, #tpu.memory_space<vmem>>, vector<1x1x128xf32>,
    return
  }
  func.func @transform_0(%arg0: i32) -> (i32, i32) {
    %c0_i32 = arith.constant 0 : i32
    %c0_i32_0 = arith.constant 0 : i32
    return %arg0, %c0_i32 : i32, i32
  }
  func.func @transform_1(%arg0: i32) -> (i32, i32) {
    %c0_i32 = arith.constant 0 : i32
    %c0_i32_0 = arith.constant 0 : i32
    %c0_i32_1 = arith.constant 0 : i32
    return %c0_i32, %c0_i32_0 : i32, i32
  }
  func.func @transform_2(%arg0: i32) -> (i32, i32, i32) {
    %c0_i32 = arith.constant 0 : i32
    %c0_i32_0 = arith.constant 0 : i32
    %c0_i32_1 = arith.constant 0 : i32
    return %arg0, %c0_i32, %c0_i32_0 : i32, i32, i32
  }
  func.func @transform_3(%arg0: i32) -> (i32, i32, i32) {
    %c0_i32 = arith.constant 0 : i32
    %c0_i32_0 = arith.constant 0 : i32
    %c0_i32_1 = arith.constant 0 : i32
    return %arg0, %c0_i32, %c0_i32_0 : i32, i32, i32
  }
}

module attributes {stable_mosaic.version = 11 : i64} {
  func.func @_convt_bn_lrelu_kernel(%arg0: i32, %arg1: memref<256x128xbf16, #tpu.memory_space<vmem>>, %arg2: memref<128x128xbf16, #tpu.memory_space<vmem>>, %arg3: memref<1x128xf32, #tpu.memory_space<vmem>>, %arg4: memref<1x128xf32, #tpu.memory_space<vmem>>, %arg5: memref<256x128xbf16, #tpu.memory_space<vmem>>) attributes {dimension_semantics = [#tpu.dimension_semantics<parallel>], iteration_bounds = array<i64: 2>, scalar_prefetch = 0 : i64, scratch_operands = 0 : i64, tpu.core_type = #tpu.core_type<tc>, window_params = [{transform_indices = @transform_0, window_bounds = array<i64: 256, 128>}, {pipeline_mode = #tpu.pipeline_mode<synchronous>, transform_indices = @transform_1, window_bounds = array<i64: 128, 128>}, {pipeline_mode = #tpu.pipeline_mode<synchronous>, transform_indices = @transform_2, window_bounds = array<i64: 1, 128>}, {pipeline_mode = #tpu.pipeline_mode<synchronous>, transform_indices = @transform_3, window_bounds = array<i64: 1, 128>}, {transform_indices = @transform_4, window_bounds = array<i64: 256, 128>}]} {
    %c0 = arith.constant 0 : index
    %c0_0 = arith.constant 0 : index
    %0 = vector.load %arg1[%c0, %c0_0] : memref<256x128xbf16, #tpu.memory_space<vmem>>, vector<256x128xbf16>
    %c0_1 = arith.constant 0 : index
    %c0_2 = arith.constant 0 : index
    %1 = vector.load %arg2[%c0_1, %c0_2] : memref<128x128xbf16, #tpu.memory_space<vmem>>, vector<128x128xbf16>
    %cst = arith.constant dense<0.000000e+00> : vector<256x128xf32>
    %2 = tpu.matmul %0, %1, %cst {dimension_numbers = #tpu.dot_dimension_numbers<[1], [0], [0], [1], [0, 0, 1, 1], [], []>} : vector<256x128xbf16>, vector<128x128xbf16>, vector<256x128xf32> -> vector<256x128xf32>
    %c0_3 = arith.constant 0 : index
    %c0_4 = arith.constant 0 : index
    %3 = vector.load %arg3[%c0_3, %c0_4] : memref<1x128xf32, #tpu.memory_space<vmem>>, vector<1x128xf32>
    %4 = vector.broadcast %3 : vector<1x128xf32> to vector<256x128xf32>
    %5 = arith.mulf %2, %4 : vector<256x128xf32>
    %c0_5 = arith.constant 0 : index
    %c0_6 = arith.constant 0 : index
    %6 = vector.load %arg4[%c0_5, %c0_6] : memref<1x128xf32, #tpu.memory_space<vmem>>, vector<1x128xf32>
    %7 = vector.broadcast %6 : vector<1x128xf32> to vector<256x128xf32>
    %8 = arith.addf %5, %7 : vector<256x128xf32>
    %cst_7 = arith.constant 0.000000e+00 : f32
    %9 = vector.broadcast %cst_7 : f32 to vector<256x128xf32>
    %10 = arith.cmpf oge, %8, %9 : vector<256x128xf32>
    %cst_8 = arith.constant 1.000000e-01 : f32
    %11 = vector.broadcast %cst_8 : f32 to vector<256x128xf32>
    %12 = arith.mulf %11, %8 : vector<256x128xf32>
    %13 = arith.select %10, %8, %12 : vector<256x128xi1>, vector<256x128xf32>
    %14 = arith.truncf %13 : vector<256x128xf32> to vector<256x128xbf16>
    %c0_9 = arith.constant 0 : index
    %c0_10 = arith.constant 0 : index
    %15 = vector.load %arg5[%c0_9, %c0_10] : memref<256x128xbf16, #tpu.memory_space<vmem>>, vector<256x128xbf16>
    tpu.vector_store %arg5[%c0_9, %c0_10], %14 {strides = array<i32>} : memref<256x128xbf16, #tpu.memory_space<vmem>>, vector<256x128xbf16>,
    return
  }
  func.func @transform_0(%arg0: i32) -> (i32, i32) {
    %c0_i32 = arith.constant 0 : i32
    %c0_i32_0 = arith.constant 0 : i32
    return %arg0, %c0_i32 : i32, i32
  }
  func.func @transform_1(%arg0: i32) -> (i32, i32) {
    %c0_i32 = arith.constant 0 : i32
    %c0_i32_0 = arith.constant 0 : i32
    %c0_i32_1 = arith.constant 0 : i32
    return %c0_i32, %c0_i32_0 : i32, i32
  }
  func.func @transform_2(%arg0: i32) -> (i32, i32) {
    %c0_i32 = arith.constant 0 : i32
    %c0_i32_0 = arith.constant 0 : i32
    %c0_i32_1 = arith.constant 0 : i32
    return %c0_i32, %c0_i32_0 : i32, i32
  }
  func.func @transform_3(%arg0: i32) -> (i32, i32) {
    %c0_i32 = arith.constant 0 : i32
    %c0_i32_0 = arith.constant 0 : i32
    %c0_i32_1 = arith.constant 0 : i32
    return %c0_i32, %c0_i32_0 : i32, i32
  }
  func.func @transform_4(%arg0: i32) -> (i32, i32) {
    %c0_i32 = arith.constant 0 : i32
    %c0_i32_0 = arith.constant 0 : i32
    return %arg0, %c0_i32 : i32, i32
  }
}

</mosaic_0001>

<llo_original>
// kernel: conv_trans_block_forward.2
$region0: #{conv_trans_block_forward.2}
  #allocation0 [shape = 'u32[]', space=smem, size = 0x4, offset = 0x4, fixed_abs, tag = 'smem constant byte address 0x4 - core index']
  #allocation1 [shape = 'u32[72,128]{1,0:T(1,128)}', space=vmem, size = 0x9000, scoped, tag = 'internal scratch']
  %s0 = inlined_call_operand.vmem [shape: bf16[512,128], index: 0, kind: input, shape index: {}]
  %s1 = inlined_call_operand.vmem [shape: bf16[128,128], index: 1, kind: input, shape index: {}]
  %s2 = inlined_call_operand.vmem [shape: f32[2,1,128], index: 2, kind: output, shape index: {0}]
  %s3 = inlined_call_operand.vmem [shape: f32[2,1,128], index: 3, kind: output, shape index: {1}]
  %4 = xla_tuple %s2, %s3
  %s5 = sld [smem:[#allocation0]]
  $region49: #{conv_trans_block_forward.2} parent=0
    _
  %s7 = ssub.s32 1, %s5
  %s8 = scalar_select 0, %s7, %s5
  loop: start=0, step=1, limit=4
  $region2: #{conv_trans_block_forward.2} parent=0 // loop_pre_header
    _
  $region3: #{conv_trans_block_forward.2} parent=0 // loop_header
    %s10 = sphi 0, %s14
    %p11 = scmp.ge.s32.totalorder %s10, 4
    %s20 = sphi 0, %s22
    %s23 = sphi 0, %s20
    %s24 = sphi 0, %s23
    %s40 = sphi 0, %s24
    %s44 = sphi 0, %s44
    %s46 = sphi 0, %s44
    %s47 = sphi 0, %s46
    %s61 = sphi 0, %s47
    %s67 = sphi 0, %s69
    %s70 = sphi 0, %s67
    %s71 = sphi 0, %s70
    %s87 = sphi 0, %s71
    %s93 = sphi 0, %s95
    %s96 = sphi 0, %s93
    %s97 = sphi 0, %s96
    %s113 = sphi 0, %s97
  $region4: #{conv_trans_block_forward.2} parent=0 // loop_header_branch
    %13 = sbr.rel (%p11) target = $region8
  $region5: #{conv_trans_block_forward.2} parent=0 // loop_body
    %s15 = ssub.s32 %s10, 1
    %s16 = ssub.s32 %s10, 2
    %s17 = sadd.s32 %s10, 1
    %s18 = ssub.s32 %s10, %s17
    %p19 = scmp.eq.s32.totalorder %s18, 0
    %s21 = sadd.s32 %s20, 1
    %s22 = scalar_select %p19, %s20, %s21
    %p25 = pneg %p19
    %p26 = scmp.eq.s32.totalorder %s10, 1
    %p27 = por %p25, %p26
    %p28 = scmp.ne.s32.totalorder %s20, %s23
    %p29 = scmp.eq.s32.totalorder %s10, 0
    %p30 = por %p28, %p29
    %p31 = scmp.ne.s32.totalorder %s20, %s23
    %p32 = scmp.eq.s32.totalorder %s15, 1
    %p33 = por %p31, %p32
    %p34 = scmp.ne.s32.totalorder %s23, %s24
    %p35 = scmp.eq.s32.totalorder %s15, 0
    %p36 = por %p34, %p35
    %p37 = scmp.ne.s32.totalorder %s23, %s24
    %p38 = scmp.eq.s32.totalorder %s16, 1
    %p39 = por %p37, %p38
    %p41 = scmp.ne.s32.totalorder %s24, %s40
    %p42 = scmp.eq.s32.totalorder %s16, 0
    %p43 = por %p41, %p42
    %s45 = sadd.s32 %s44, 1
    %p48 = scmp.eq.s32.totalorder %s10, 1
    %p49 = scmp.ne.s32.totalorder %s44, %s46
    %p50 = scmp.eq.s32.totalorder %s10, 0
    %p51 = por %p49, %p50
    %p52 = scmp.ne.s32.totalorder %s44, %s46
    %p53 = scmp.eq.s32.totalorder %s15, 1
    %p54 = por %p52, %p53
    %p55 = scmp.ne.s32.totalorder %s46, %s47
    %p56 = scmp.eq.s32.totalorder %s15, 0
    %p57 = por %p55, %p56
    %p58 = scmp.ne.s32.totalorder %s46, %s47
    %p59 = scmp.eq.s32.totalorder %s16, 1
    %p60 = por %p58, %p59
    %p62 = scmp.ne.s32.totalorder %s47, %s61
    %p63 = scmp.eq.s32.totalorder %s16, 0
    %p64 = por %p62, %p63
    %s65 = ssub.s32 %s10, %s17
    %p66 = scmp.eq.s32.totalorder %s65, 0
    %s68 = sadd.s32 %s67, 1
    %s69 = scalar_select %p66, %s67, %s68
    %p72 = pneg %p66
    %p73 = scmp.eq.s32.totalorder %s10, 1
    %p74 = por %p72, %p73
    %p75 = scmp.ne.s32.totalorder %s67, %s70
    %p76 = scmp.eq.s32.totalorder %s10, 0
    %p77 = por %p75, %p76
    %p78 = scmp.ne.s32.totalorder %s67, %s70
    %p79 = scmp.eq.s32.totalorder %s15, 1
    %p80 = por %p78, %p79
    %p81 = scmp.ne.s32.totalorder %s70, %s71
    %p82 = scmp.eq.s32.totalorder %s15, 0
    %p83 = por %p81, %p82
    %p84 = scmp.ne.s32.totalorder %s70, %s71
    %p85 = scmp.eq.s32.totalorder %s16, 1
    %p86 = por %p84, %p85
    %p88 = scmp.ne.s32.totalorder %s71, %s87
    %p89 = scmp.eq.s32.totalorder %s16, 0
    %p90 = por %p88, %p89
    %s91 = ssub.s32 %s10, %s17
    %p92 = scmp.eq.s32.totalorder %s91, 0
    %s94 = sadd.s32 %s93, 1
    %s95 = scalar_select %p92, %s93, %s94
    %p98 = pneg %p92
    %p99 = scmp.eq.s32.totalorder %s10, 1
    %p100 = por %p98, %p99
    %p101 = scmp.ne.s32.totalorder %s93, %s96
    %p102 = scmp.eq.s32.totalorder %s10, 0
    %p103 = por %p101, %p102
    %p104 = scmp.ne.s32.totalorder %s93, %s96
    %p105 = scmp.eq.s32.totalorder %s15, 1
    %p106 = por %p104, %p105
    %p107 = scmp.ne.s32.totalorder %s96, %s97
    %p108 = scmp.eq.s32.totalorder %s15, 0
    %p109 = por %p107, %p108
    %p110 = scmp.ne.s32.totalorder %s96, %s97
    %p111 = scmp.eq.s32.totalorder %s16, 1
    %p112 = por %p110, %p111
    %p114 = scmp.ne.s32.totalorder %s97, %s113
    %p115 = scmp.eq.s32.totalorder %s16, 0
    %p116 = por %p114, %p115
    %p117 = scmp.le.s32.totalorder 1, %s10
    %p118 = scmp.lt.s32.totalorder %s10, 3
    %p119 = pnand %p117, %p118
    %p120 = pneg %p119
    // Predicated region
    $region9: #{conv_trans_block_forward.2} parent=5 // pred_check
      _
    $region10: #{conv_trans_block_forward.2} parent=5 // pred_check_branch
      %122 = sbr.rel (%p119) target = $region12
    $region11: #{conv_trans_block_forward.2} parent=5 // pred_region
      %s123 = ssub.s32 %s10, 1
      // Predicated region
      $region13: #{conv_trans_block_forward.2} parent=11 // pred_check
        %p124 = pneg %p57
      $region14: #{conv_trans_block_forward.2} parent=11 // pred_check_branch
        %126 = sbr.rel (%p124) target = $region16
      $region15: #{conv_trans_block_forward.2} parent=11 // pred_region
        _
      $region16: #{conv_trans_block_forward.2} parent=11 // pred_fallthru
        _
    $region12: #{conv_trans_block_forward.2} parent=5 // pred_fallthru
      _
    %p127 = scmp.lt.s32.totalorder %s10, 2
    // Predicated region
    $region17: #{conv_trans_block_forward.2} parent=5 // pred_check
      %p128 = pneg %p127
    $region18: #{conv_trans_block_forward.2} parent=5 // pred_check_branch
      %130 = sbr.rel (%p128) target = $region20
    $region19: #{conv_trans_block_forward.2} parent=5 // pred_region
      // Predicated region
      $region21: #{conv_trans_block_forward.2} parent=19 // pred_check
        %p131 = pneg %p30
      $region22: #{conv_trans_block_forward.2} parent=19 // pred_check_branch
        %133 = sbr.rel (%p131) target = $region24
      $region23: #{conv_trans_block_forward.2} parent=19 // pred_region
        %s134 = smul.u32 32, %s10
        %p135 = scmp.lt.s32.totalorder %s134, 63
        %s136 = scalar_select %p135, %s134, 63
        %s137 = smul.addr %s136, 4
        %s138 = scalar_lea.vmem %s0, %s137
        %s139 = smul.u32 32, %s10
      $region24: #{conv_trans_block_forward.2} parent=19 // pred_fallthru
        _
    $region20: #{conv_trans_block_forward.2} parent=5 // pred_fallthru
      _
    %p140 = scmp.le.s32.totalorder 1, %s10
    %p141 = scmp.lt.s32.totalorder %s10, 3
    %p142 = pnand %p140, %p141
    %p143 = pneg %p142
    // Predicated region
    $region25: #{conv_trans_block_forward.2} parent=5 // pred_check
      _
    $region26: #{conv_trans_block_forward.2} parent=5 // pred_check_branch
      %145 = sbr.rel (%p142) target = $region28
    $region27: #{conv_trans_block_forward.2} parent=5 // pred_region
      %s146 = ssub.s32 %s10, 1
      %s147 = smul.u32 32, %s15
      %p148 = scmp.lt.s32.totalorder %s147, 63
      %s149 = scalar_select %p148, %s147, 63
      %s150 = smul.addr %s149, 4
      %s151 = scalar_lea.vmem %s0, %s150
      %p152 = pneg %p36
      %p153 = pneg %p33
      %p154 = pneg %p57
      %p155 = pneg %p54
      %p156 = pneg %p83
      %p157 = pneg %p80
      %p158 = scmp.lt.s32.totalorder %s15, 1
      %s159 = scalar_select %p158, %s15, 1
      %s160 = scalar_lea.vmem %s2, %s159
      %p161 = pneg %p109
      %p162 = pneg %p106
      %p163 = scmp.lt.s32.totalorder %s15, 1
      %s164 = scalar_select %p163, %s15, 1
      %s165 = scalar_lea.vmem %s3, %s164
      %s166 = smul.u32 32, %s15
      %p167 = scmp.lt.s32.totalorder %s166, 63
      %s168 = scalar_select %p167, %s166, 63
      %s169 = smul.addr %s168, 4
      %s170 = scalar_lea.vmem %s0, %s169
      %s171 = smul.u32 32, %s15
      %p172 = scmp.lt.s32.totalorder %s15, 1
      %s173 = scalar_select %p172, %s15, 1
      %s174 = scalar_lea.vmem %s2, %s173
      %p175 = scmp.lt.s32.totalorder %s15, 1
      %s176 = scalar_select %p175, %s15, 1
      %s177 = scalar_lea.vmem %s3, %s176
      %v178 = vld [vmem:[%s170] sm:$0xf]
      %v179 = vld [vmem:[%s170 + $0x4] sm:$0xf]
      %v180 = vld [vmem:[%s170 + $0x8] sm:$0xf]
      %v181 = vld [vmem:[%s170 + $0xc] sm:$0xf]
      %v182 = vld [vmem:[%s170 + $0x10] sm:$0xf]
      %v183 = vld [vmem:[%s170 + $0x14] sm:$0xf]
      %v184 = vld [vmem:[%s170 + $0x18] sm:$0xf]
      %v185 = vld [vmem:[%s170 + $0x1c] sm:$0xf]
      %v186 = vld [vmem:[%s170 + $0x20] sm:$0xf]
      %v187 = vld [vmem:[%s170 + $0x24] sm:$0xf]
      %v188 = vld [vmem:[%s170 + $0x28] sm:$0xf]
      %v189 = vld [vmem:[%s170 + $0x2c] sm:$0xf]
      %v190 = vld [vmem:[%s170 + $0x30] sm:$0xf]
      %v191 = vld [vmem:[%s170 + $0x34] sm:$0xf]
      %v192 = vld [vmem:[%s170 + $0x38] sm:$0xf]
      %v193 = vld [vmem:[%s170 + $0x3c] sm:$0xf]
      %v194 = vld [vmem:[%s170 + $0x40] sm:$0xf]
      %v195 = vld [vmem:[%s170 + $0x44] sm:$0xf]
      %v196 = vld [vmem:[%s170 + $0x48] sm:$0xf]
      %v197 = vld [vmem:[%s170 + $0x4c] sm:$0xf]
      %v198 = vld [vmem:[%s170 + $0x50] sm:$0xf]
      %v199 = vld [vmem:[%s170 + $0x54] sm:$0xf]
      %v200 = vld [vmem:[%s170 + $0x58] sm:$0xf]
      %v201 = vld [vmem:[%s170 + $0x5c] sm:$0xf]
      %v202 = vld [vmem:[%s170 + $0x60] sm:$0xf]
      %v203 = vld [vmem:[%s170 + $0x64] sm:$0xf]
      %v204 = vld [vmem:[%s170 + $0x68] sm:$0xf]
      %v205 = vld [vmem:[%s170 + $0x6c] sm:$0xf]
      %v206 = vld [vmem:[%s170 + $0x70] sm:$0xf]
      %v207 = vld [vmem:[%s170 + $0x74] sm:$0xf]
      %v208 = vld [vmem:[%s170 + $0x78] sm:$0xf]
      %v209 = vld [vmem:[%s170 + $0x7c] sm:$0xf]
      %v210 = vld [vmem:[%s1] sm:$0xf]
      %v211 = vld [vmem:[%s1 + $0x4] sm:$0xf]
      %v212 = vld [vmem:[%s1 + $0x8] sm:$0xf]
      %v213 = vld [vmem:[%s1 + $0xc] sm:$0xf]
      %v214 = vld [vmem:[%s1 + $0x10] sm:$0xf]
      %v215 = vld [vmem:[%s1 + $0x14] sm:$0xf]
      %v216 = vld [vmem:[%s1 + $0x18] sm:$0xf]
      %v217 = vld [vmem:[%s1 + $0x1c] sm:$0xf]
      %v218 = vld [vmem:[%s1 + $0x20] sm:$0xf]
      %v219 = vld [vmem:[%s1 + $0x24] sm:$0xf]
      %v220 = vld [vmem:[%s1 + $0x28] sm:$0xf]
      %v221 = vld [vmem:[%s1 + $0x2c] sm:$0xf]
      %v222 = vld [vmem:[%s1 + $0x30] sm:$0xf]
      %v223 = vld [vmem:[%s1 + $0x34] sm:$0xf]
      %v224 = vld [vmem:[%s1 + $0x38] sm:$0xf]
      %v225 = vld [vmem:[%s1 + $0x3c] sm:$0xf]
      %v258 = vunpack.c.l.b16 %v178
      %v259 = vunpack.c.l.b16 %v179
      %v260 = vunpack.c.l.b16 %v180
      %v261 = vunpack.c.l.b16 %v181
      %v262 = vunpack.c.l.b16 %v182
      %v263 = vunpack.c.l.b16 %v183
      %v264 = vunpack.c.l.b16 %v184
      %v265 = vunpack.c.l.b16 %v185
      %v266 = vunpack.c.l.b16 %v186
      %v267 = vunpack.c.l.b16 %v187
      %v268 = vunpack.c.l.b16 %v188
      %v269 = vunpack.c.l.b16 %v189
      %v270 = vunpack.c.l.b16 %v190
      %v271 = vunpack.c.l.b16 %v191
      %v272 = vunpack.c.l.b16 %v192
      %v273 = vunpack.c.l.b16 %v193
      %v274 = vunpack.c.l.b16 %v194
      %v275 = vunpack.c.l.b16 %v195
      %v276 = vunpack.c.l.b16 %v196
      %v277 = vunpack.c.l.b16 %v197
      %v278 = vunpack.c.l.b16 %v198
      %v279 = vunpack.c.l.b16 %v199
      %v280 = vunpack.c.l.b16 %v200
      %v281 = vunpack.c.l.b16 %v201
      %v282 = vunpack.c.l.b16 %v202
      %v283 = vunpack.c.l.b16 %v203
      %v284 = vunpack.c.l.b16 %v204
      %v285 = vunpack.c.l.b16 %v205
      %v286 = vunpack.c.l.b16 %v206
      %v287 = vunpack.c.l.b16 %v207
      %v288 = vunpack.c.l.b16 %v208
      %v289 = vunpack.c.l.b16 %v209
      %v290 = vpack.c.b16 %v259, %v258
      %v291 = vpack.c.b16 %v261, %v260
      %v292 = vpack.c.b16 %v263, %v262
      %v293 = vpack.c.b16 %v265, %v264
      %v294 = vpack.c.b16 %v267, %v266
      %v295 = vpack.c.b16 %v269, %v268
      %v296 = vpack.c.b16 %v271, %v270
      %v297 = vpack.c.b16 %v273, %v272
      %v298 = vpack.c.b16 %v275, %v274
      %v299 = vpack.c.b16 %v277, %v276
      %v300 = vpack.c.b16 %v279, %v278
      %v301 = vpack.c.b16 %v281, %v280
      %v302 = vpack.c.b16 %v283, %v282
      %v303 = vpack.c.b16 %v285, %v284
      %v304 = vpack.c.b16 %v287, %v286
      %v305 = vpack.c.b16 %v289, %v288
      %v338 = vunpack.c.l.b16 %v210
      %v339 = vunpack.c.l.b16 %v211
      %v340 = vunpack.c.l.b16 %v212
      %v341 = vunpack.c.l.b16 %v213
      %v342 = vunpack.c.l.b16 %v214
      %v343 = vunpack.c.l.b16 %v215
      %v344 = vunpack.c.l.b16 %v216
      %v345 = vunpack.c.l.b16 %v217
      %v346 = vunpack.c.l.b16 %v218
      %v347 = vunpack.c.l.b16 %v219
      %v348 = vunpack.c.l.b16 %v220
      %v349 = vunpack.c.l.b16 %v221
      %v350 = vunpack.c.l.b16 %v222
      %v351 = vunpack.c.l.b16 %v223
      %v352 = vunpack.c.l.b16 %v224
      %v353 = vunpack.c.l.b16 %v225
      %v354 = vpack.c.b16 %v339, %v338
      %v355 = vpack.c.b16 %v341, %v340
      %v356 = vpack.c.b16 %v343, %v342
      %v357 = vpack.c.b16 %v345, %v344
      %v358 = vpack.c.b16 %v347, %v346
      %v359 = vpack.c.b16 %v349, %v348
      %v360 = vpack.c.b16 %v351, %v350
      %v361 = vpack.c.b16 %v353, %v352
      %370 = vmatpush.bf16.msra.mxu0 %v361
      %371 = vmatpush.bf16.msra.mxu0 %v360
      %372 = vmatpush.bf16.msra.mxu0 %v359
      %373 = vmatpush.bf16.msra.mxu0 %v358
      %374 = vmatpush.bf16.msra.mxu0 %v357
      %375 = vmatpush.bf16.msra.mxu0 %v356
      %376 = vmatpush.bf16.msra.mxu0 %v355
      %377 = vmatpush.bf16.msra.mxu0 %v354
      %378 = vmatmul.bf16.gmra.mxu0 %v290
      %v379 = vpop.f32.mrf.mxu0
      %v380 = vadd.f32 0.0, %v379
      %v381 = vpop.f32.mrf.mxu0
      %v382 = vadd.f32 0.0, %v381
      %383 = vmatmul.bf16.gmra.mxu0 %v291
      %v384 = vpop.f32.mrf.mxu0
      %v385 = vadd.f32 0.0, %v384
      %v386 = vpop.f32.mrf.mxu0
      %v387 = vadd.f32 0.0, %v386
      %388 = vmatmul.bf16.gmra.mxu0 %v292
      %v389 = vpop.f32.mrf.mxu0
      %v390 = vadd.f32 0.0, %v389
      %v391 = vpop.f32.mrf.mxu0
      %v392 = vadd.f32 0.0, %v391
      %393 = vmatmul.bf16.gmra.mxu0 %v293
      %v394 = vpop.f32.mrf.mxu0
      %v395 = vadd.f32 0.0, %v394
      %v396 = vpop.f32.mrf.mxu0
      %v397 = vadd.f32 0.0, %v396
      %398 = vmatmul.bf16.gmra.mxu0 %v294
      %v399 = vpop.f32.mrf.mxu0
      %v400 = vadd.f32 0.0, %v399
      %v401 = vpop.f32.mrf.mxu0
      %v402 = vadd.f32 0.0, %v401
      %403 = vmatmul.bf16.gmra.mxu0 %v295
      %v404 = vpop.f32.mrf.mxu0
      %v405 = vadd.f32 0.0, %v404
      %v406 = vpop.f32.mrf.mxu0
      %v407 = vadd.f32 0.0, %v406
      %408 = vmatmul.bf16.gmra.mxu0 %v296
      %v409 = vpop.f32.mrf.mxu0
      %v410 = vadd.f32 0.0, %v409
      %v411 = vpop.f32.mrf.mxu0
      %v412 = vadd.f32 0.0, %v411
      %413 = vmatmul.bf16.gmra.mxu0 %v297
      %v414 = vpop.f32.mrf.mxu0
      %v415 = vadd.f32 0.0, %v414
      %v416 = vpop.f32.mrf.mxu0
      %v417 = vadd.f32 0.0, %v416
      %418 = vmatmul.bf16.gmra.mxu0 %v298
      %v419 = vpop.f32.mrf.mxu0
      %v420 = vadd.f32 0.0, %v419
      %v421 = vpop.f32.mrf.mxu0
      %v422 = vadd.f32 0.0, %v421
      %423 = vmatmul.bf16.gmra.mxu0 %v299
      %v424 = vpop.f32.mrf.mxu0
      %v425 = vadd.f32 0.0, %v424
      %v426 = vpop.f32.mrf.mxu0
      %v427 = vadd.f32 0.0, %v426
      %428 = vmatmul.bf16.gmra.mxu0 %v300
      %v429 = vpop.f32.mrf.mxu0
      %v430 = vadd.f32 0.0, %v429
      %v431 = vpop.f32.mrf.mxu0
      %v432 = vadd.f32 0.0, %v431
      %433 = vmatmul.bf16.gmra.mxu0 %v301
      %v434 = vpop.f32.mrf.mxu0
      %v435 = vadd.f32 0.0, %v434
      %v436 = vpop.f32.mrf.mxu0
      %v437 = vadd.f32 0.0, %v436
      %438 = vmatmul.bf16.gmra.mxu0 %v302
      %v439 = vpop.f32.mrf.mxu0
      %v440 = vadd.f32 0.0, %v439
      %v441 = vpop.f32.mrf.mxu0
      %v442 = vadd.f32 0.0, %v441
      %443 = vmatmul.bf16.gmra.mxu0 %v303
      %v444 = vpop.f32.mrf.mxu0
      %v445 = vadd.f32 0.0, %v444
      %v446 = vpop.f32.mrf.mxu0
      %v447 = vadd.f32 0.0, %v446
      %448 = vmatmul.bf16.gmra.mxu0 %v304
      %v449 = vpop.f32.mrf.mxu0
      %v450 = vadd.f32 0.0, %v449
      %v451 = vpop.f32.mrf.mxu0
      %v452 = vadd.f32 0.0, %v451
      %453 = vmatmul.bf16.gmra.mxu0 %v305
      %v454 = vpop.f32.mrf.mxu0
      %v455 = vadd.f32 0.0, %v454
      %v456 = vpop.f32.mrf.mxu0
      %v457 = vadd.f32 0.0, %v456
      %458 = vdwg.mxu0
      %v459 = vadd.f32 %v380, %v382
      %v460 = vadd.f32 %v459, %v385
      %v461 = vadd.f32 %v460, %v387
      %v462 = vadd.f32 %v461, %v390
      %v463 = vadd.f32 %v462, %v392
      %v464 = vadd.f32 %v463, %v395
      %v465 = vadd.f32 %v464, %v397
      %v466 = vadd.f32 %v465, %v400
      %v467 = vadd.f32 %v466, %v402
      %v468 = vadd.f32 %v467, %v405
      %v469 = vadd.f32 %v468, %v407
      %v470 = vadd.f32 %v469, %v410
      %v471 = vadd.f32 %v470, %v412
      %v472 = vadd.f32 %v471, %v415
      %v473 = vadd.f32 %v472, %v417
      %v474 = vadd.f32 %v473, %v420
      %v475 = vadd.f32 %v474, %v422
      %v476 = vadd.f32 %v475, %v425
      %v477 = vadd.f32 %v476, %v427
      %v478 = vadd.f32 %v477, %v430
      %v479 = vadd.f32 %v478, %v432
      %v480 = vadd.f32 %v479, %v435
      %v481 = vadd.f32 %v480, %v437
      %v482 = vadd.f32 %v481, %v440
      %v483 = vadd.f32 %v482, %v442
      %v484 = vadd.f32 %v483, %v445
      %v485 = vadd.f32 %v484, %v447
      %v486 = vadd.f32 %v485, %v450
      %v487 = vadd.f32 %v486, %v452
      %v488 = vadd.f32 %v487, %v455
      %v489 = vadd.f32 %v488, %v457
      %v490 = vrot.slane %v489, 4
      %v491 = vadd.f32 %v489, %v490
      %v492 = vrot.slane %v491, 2
      %v493 = vadd.f32 %v491, %v492
      %v494 = vrot.slane %v493, 1
      %v495 = vadd.f32 %v493, %v494
      %496 = vst [vmem:[%s174] sm:$0x1] %v495
      %v497 = vmul.f32 %v380, %v380
      %v498 = vmul.f32 %v382, %v382
      %v499 = vmul.f32 %v385, %v385
      %v500 = vmul.f32 %v387, %v387
      %v501 = vmul.f32 %v390, %v390
      %v502 = vmul.f32 %v392, %v392
      %v503 = vmul.f32 %v395, %v395
      %v504 = vmul.f32 %v397, %v397
      %v505 = vmul.f32 %v400, %v400
      %v506 = vmul.f32 %v402, %v402
      %v507 = vmul.f32 %v405, %v405
      %v508 = vmul.f32 %v407, %v407
      %v509 = vmul.f32 %v410, %v410
      %v510 = vmul.f32 %v412, %v412
      %v511 = vmul.f32 %v415, %v415
      %v512 = vmul.f32 %v417, %v417
      %v513 = vmul.f32 %v420, %v420
      %v514 = vmul.f32 %v422, %v422
      %v515 = vmul.f32 %v425, %v425
      %v516 = vmul.f32 %v427, %v427
      %v517 = vmul.f32 %v430, %v430
      %v518 = vmul.f32 %v432, %v432
      %v519 = vmul.f32 %v435, %v435
      %v520 = vmul.f32 %v437, %v437
      %v521 = vmul.f32 %v440, %v440
      %v522 = vmul.f32 %v442, %v442
      %v523 = vmul.f32 %v445, %v445
      %v524 = vmul.f32 %v447, %v447
      %v525 = vmul.f32 %v450, %v450
      %v526 = vmul.f32 %v452, %v452
      %v527 = vmul.f32 %v455, %v455
      %v528 = vmul.f32 %v457, %v457
      %v529 = vadd.f32 %v497, %v498
      %v530 = vadd.f32 %v529, %v499
      %v531 = vadd.f32 %v530, %v500
      %v532 = vadd.f32 %v531, %v501
      %v533 = vadd.f32 %v532, %v502
      %v534 = vadd.f32 %v533, %v503
      %v535 = vadd.f32 %v534, %v504
      %v536 = vadd.f32 %v535, %v505
      %v537 = vadd.f32 %v536, %v506
      %v538 = vadd.f32 %v537, %v507
      %v539 = vadd.f32 %v538, %v508
      %v540 = vadd.f32 %v539, %v509
      %v541 = vadd.f32 %v540, %v510
      %v542 = vadd.f32 %v541, %v511
      %v543 = vadd.f32 %v542, %v512
      %v544 = vadd.f32 %v543, %v513
      %v545 = vadd.f32 %v544, %v514
      %v546 = vadd.f32 %v545, %v515
      %v547 = vadd.f32 %v546, %v516
      %v548 = vadd.f32 %v547, %v517
      %v549 = vadd.f32 %v548, %v518
      %v550 = vadd.f32 %v549, %v519
      %v551 = vadd.f32 %v550, %v520
      %v552 = vadd.f32 %v551, %v521
      %v553 = vadd.f32 %v552, %v522
      %v554 = vadd.f32 %v553, %v523
      %v555 = vadd.f32 %v554, %v524
      %v556 = vadd.f32 %v555, %v525
      %v557 = vadd.f32 %v556, %v526
      %v558 = vadd.f32 %v557, %v527
      %v559 = vadd.f32 %v558, %v528
      %v560 = vrot.slane %v559, 4
      %v561 = vadd.f32 %v559, %v560
      %v562 = vrot.slane %v561, 2
      %v563 = vadd.f32 %v561, %v562
      %v564 = vrot.slane %v563, 1
      %v565 = vadd.f32 %v563, %v564
      %566 = vst [vmem:[%s177] sm:$0x1] %v565
      %p567 = scmp.lt.s32.totalorder %s15, 1
      %s568 = scalar_select %p567, %s15, 1
      %s569 = scalar_lea.vmem %s2, %s568
      %p570 = scmp.lt.s32.totalorder %s15, 1
      %s571 = scalar_select %p570, %s15, 1
      %s572 = scalar_lea.vmem %s3, %s571
      // Predicated region
      $region29: #{conv_trans_block_forward.2} parent=27 // pred_check
        %p573 = pneg %p80
      $region30: #{conv_trans_block_forward.2} parent=27 // pred_check_branch
        %575 = sbr.rel (%p573) target = $region32
      $region31: #{conv_trans_block_forward.2} parent=27 // pred_region
        _
      $region32: #{conv_trans_block_forward.2} parent=27 // pred_fallthru
        _
      // Predicated region
      $region33: #{conv_trans_block_forward.2} parent=27 // pred_check
        %p576 = pneg %p106
      $region34: #{conv_trans_block_forward.2} parent=27 // pred_check_branch
        %578 = sbr.rel (%p576) target = $region36
      $region35: #{conv_trans_block_forward.2} parent=27 // pred_region
        _
      $region36: #{conv_trans_block_forward.2} parent=27 // pred_fallthru
        _
    $region28: #{conv_trans_block_forward.2} parent=5 // pred_fallthru
      _
    %p579 = scmp.le.s32.totalorder 2, %s10
    // Predicated region
    $region37: #{conv_trans_block_forward.2} parent=5 // pred_check
      %p580 = pneg %p579
    $region38: #{conv_trans_block_forward.2} parent=5 // pred_check_branch
      %582 = sbr.rel (%p580) target = $region40
    $region39: #{conv_trans_block_forward.2} parent=5 // pred_region
      %s583 = ssub.s32 %s10, 2
      // Predicated region
      $region41: #{conv_trans_block_forward.2} parent=39 // pred_check
        %p584 = pneg %p86
      $region42: #{conv_trans_block_forward.2} parent=39 // pred_check_branch
        %586 = sbr.rel (%p584) target = $region44
      $region43: #{conv_trans_block_forward.2} parent=39 // pred_region
        %p587 = scmp.lt.s32.totalorder %s16, 1
        %s588 = scalar_select %p587, %s16, 1
        %s589 = scalar_lea.vmem %s2, %s588
      $region44: #{conv_trans_block_forward.2} parent=39 // pred_fallthru
        _
      // Predicated region
      $region45: #{conv_trans_block_forward.2} parent=39 // pred_check
        %p590 = pneg %p112
      $region46: #{conv_trans_block_forward.2} parent=39 // pred_check_branch
        %592 = sbr.rel (%p590) target = $region48
      $region47: #{conv_trans_block_forward.2} parent=39 // pred_region
        %p593 = scmp.lt.s32.totalorder %s16, 1
        %s594 = scalar_select %p593, %s16, 1
        %s595 = scalar_lea.vmem %s3, %s594
      $region48: #{conv_trans_block_forward.2} parent=39 // pred_fallthru
        _
    $region40: #{conv_trans_block_forward.2} parent=5 // pred_fallthru
      _
  $region6: #{conv_trans_block_forward.2} parent=0 // loop_footer
    %s14 = sadd.s32 1, %s10
  $region7: #{conv_trans_block_forward.2} parent=0 // loop_footer_branch
    %9 = sbr.rel target = $region3
  $region8: #{conv_trans_block_forward.2} parent=0 // loop_exit
    _

// kernel: conv_trans_block_forward.3
$region0: #{conv_trans_block_forward.3}
  #allocation0 [shape = 'u32[]', space=smem, size = 0x4, offset = 0x4, fixed_abs, tag = 'smem constant byte address 0x4 - core index']
  #allocation1 [shape = 'u32[72,128]{1,0:T(1,128)}', space=vmem, size = 0x9000, scoped, tag = 'internal scratch']
  %s0 = inlined_call_operand.vmem [shape: bf16[512,128], index: 0, kind: input, shape index: {}]
  %s1 = inlined_call_operand.vmem [shape: bf16[128,128], index: 1, kind: input, shape index: {}]
  %s2 = inlined_call_operand.vmem [shape: f32[1,128], index: 2, kind: input, shape index: {}]
  %s3 = inlined_call_operand.vmem [shape: f32[1,128], index: 3, kind: input, shape index: {}]
  %s4 = inlined_call_operand.vmem [shape: bf16[512,128], index: 4, kind: output, shape index: {}]
  %s5 = sld [smem:[#allocation0]]
  $region49: #{conv_trans_block_forward.3} parent=0
    _
  %s7 = ssub.s32 1, %s5
  %s8 = scalar_select 0, %s7, %s5
  loop: start=0, step=1, limit=4
  $region2: #{conv_trans_block_forward.3} parent=0 // loop_pre_header
    _
  $region3: #{conv_trans_block_forward.3} parent=0 // loop_header
    %s10 = sphi 0, %s14
    %p11 = scmp.ge.s32.totalorder %s10, 4
    %s20 = sphi 0, %s22
    %s23 = sphi 0, %s20
    %s24 = sphi 0, %s23
    %s40 = sphi 0, %s24
    %s44 = sphi 0, %s44
    %s46 = sphi 0, %s44
    %s47 = sphi 0, %s46
    %s61 = sphi 0, %s47
    %s65 = sphi 0, %s65
    %s67 = sphi 0, %s65
    %s68 = sphi 0, %s67
    %s82 = sphi 0, %s68
    %s86 = sphi 0, %s86
    %s88 = sphi 0, %s86
    %s89 = sphi 0, %s88
    %s103 = sphi 0, %s89
    %s109 = sphi 0, %s111
    %s112 = sphi 0, %s109
    %s113 = sphi 0, %s112
    %s129 = sphi 0, %s113
  $region4: #{conv_trans_block_forward.3} parent=0 // loop_header_branch
    %13 = sbr.rel (%p11) target = $region8
  $region5: #{conv_trans_block_forward.3} parent=0 // loop_body
    %s15 = ssub.s32 %s10, 1
    %s16 = ssub.s32 %s10, 2
    %s17 = sadd.s32 %s10, 1
    %s18 = ssub.s32 %s10, %s17
    %p19 = scmp.eq.s32.totalorder %s18, 0
    %s21 = sadd.s32 %s20, 1
    %s22 = scalar_select %p19, %s20, %s21
    %p25 = pneg %p19
    %p26 = scmp.eq.s32.totalorder %s10, 1
    %p27 = por %p25, %p26
    %p28 = scmp.ne.s32.totalorder %s20, %s23
    %p29 = scmp.eq.s32.totalorder %s10, 0
    %p30 = por %p28, %p29
    %p31 = scmp.ne.s32.totalorder %s20, %s23
    %p32 = scmp.eq.s32.totalorder %s15, 1
    %p33 = por %p31, %p32
    %p34 = scmp.ne.s32.totalorder %s23, %s24
    %p35 = scmp.eq.s32.totalorder %s15, 0
    %p36 = por %p34, %p35
    %p37 = scmp.ne.s32.totalorder %s23, %s24
    %p38 = scmp.eq.s32.totalorder %s16, 1
    %p39 = por %p37, %p38
    %p41 = scmp.ne.s32.totalorder %s24, %s40
    %p42 = scmp.eq.s32.totalorder %s16, 0
    %p43 = por %p41, %p42
    %s45 = sadd.s32 %s44, 1
    %p48 = scmp.eq.s32.totalorder %s10, 1
    %p49 = scmp.ne.s32.totalorder %s44, %s46
    %p50 = scmp.eq.s32.totalorder %s10, 0
    %p51 = por %p49, %p50
    %p52 = scmp.ne.s32.totalorder %s44, %s46
    %p53 = scmp.eq.s32.totalorder %s15, 1
    %p54 = por %p52, %p53
    %p55 = scmp.ne.s32.totalorder %s46, %s47
    %p56 = scmp.eq.s32.totalorder %s15, 0
    %p57 = por %p55, %p56
    %p58 = scmp.ne.s32.totalorder %s46, %s47
    %p59 = scmp.eq.s32.totalorder %s16, 1
    %p60 = por %p58, %p59
    %p62 = scmp.ne.s32.totalorder %s47, %s61
    %p63 = scmp.eq.s32.totalorder %s16, 0
    %p64 = por %p62, %p63
    %s66 = sadd.s32 %s65, 1
    %p69 = scmp.eq.s32.totalorder %s10, 1
    %p70 = scmp.ne.s32.totalorder %s65, %s67
    %p71 = scmp.eq.s32.totalorder %s10, 0
    %p72 = por %p70, %p71
    %p73 = scmp.ne.s32.totalorder %s65, %s67
    %p74 = scmp.eq.s32.totalorder %s15, 1
    %p75 = por %p73, %p74
    %p76 = scmp.ne.s32.totalorder %s67, %s68
    %p77 = scmp.eq.s32.totalorder %s15, 0
    %p78 = por %p76, %p77
    %p79 = scmp.ne.s32.totalorder %s67, %s68
    %p80 = scmp.eq.s32.totalorder %s16, 1
    %p81 = por %p79, %p80
    %p83 = scmp.ne.s32.totalorder %s68, %s82
    %p84 = scmp.eq.s32.totalorder %s16, 0
    %p85 = por %p83, %p84
    %s87 = sadd.s32 %s86, 1
    %p90 = scmp.eq.s32.totalorder %s10, 1
    %p91 = scmp.ne.s32.totalorder %s86, %s88
    %p92 = scmp.eq.s32.totalorder %s10, 0
    %p93 = por %p91, %p92
    %p94 = scmp.ne.s32.totalorder %s86, %s88
    %p95 = scmp.eq.s32.totalorder %s15, 1
    %p96 = por %p94, %p95
    %p97 = scmp.ne.s32.totalorder %s88, %s89
    %p98 = scmp.eq.s32.totalorder %s15, 0
    %p99 = por %p97, %p98
    %p100 = scmp.ne.s32.totalorder %s88, %s89
    %p101 = scmp.eq.s32.totalorder %s16, 1
    %p102 = por %p100, %p101
    %p104 = scmp.ne.s32.totalorder %s89, %s103
    %p105 = scmp.eq.s32.totalorder %s16, 0
    %p106 = por %p104, %p105
    %s107 = ssub.s32 %s10, %s17
    %p108 = scmp.eq.s32.totalorder %s107, 0
    %s110 = sadd.s32 %s109, 1
    %s111 = scalar_select %p108, %s109, %s110
    %p114 = pneg %p108
    %p115 = scmp.eq.s32.totalorder %s10, 1
    %p116 = por %p114, %p115
    %p117 = scmp.ne.s32.totalorder %s109, %s112
    %p118 = scmp.eq.s32.totalorder %s10, 0
    %p119 = por %p117, %p118
    %p120 = scmp.ne.s32.totalorder %s109, %s112
    %p121 = scmp.eq.s32.totalorder %s15, 1
    %p122 = por %p120, %p121
    %p123 = scmp.ne.s32.totalorder %s112, %s113
    %p124 = scmp.eq.s32.totalorder %s15, 0
    %p125 = por %p123, %p124
    %p126 = scmp.ne.s32.totalorder %s112, %s113
    %p127 = scmp.eq.s32.totalorder %s16, 1
    %p128 = por %p126, %p127
    %p130 = scmp.ne.s32.totalorder %s113, %s129
    %p131 = scmp.eq.s32.totalorder %s16, 0
    %p132 = por %p130, %p131
    %p133 = scmp.le.s32.totalorder 1, %s10
    %p134 = scmp.lt.s32.totalorder %s10, 3
    %p135 = pnand %p133, %p134
    %p136 = pneg %p135
    // Predicated region
    $region9: #{conv_trans_block_forward.3} parent=5 // pred_check
      _
    $region10: #{conv_trans_block_forward.3} parent=5 // pred_check_branch
      %138 = sbr.rel (%p135) target = $region12
    $region11: #{conv_trans_block_forward.3} parent=5 // pred_region
      %s139 = ssub.s32 %s10, 1
      // Predicated region
      $region13: #{conv_trans_block_forward.3} parent=11 // pred_check
        %p140 = pneg %p57
      $region14: #{conv_trans_block_forward.3} parent=11 // pred_check_branch
        %142 = sbr.rel (%p140) target = $region16
      $region15: #{conv_trans_block_forward.3} parent=11 // pred_region
        _
      $region16: #{conv_trans_block_forward.3} parent=11 // pred_fallthru
        _
      // Predicated region
      $region17: #{conv_trans_block_forward.3} parent=11 // pred_check
        %p143 = pneg %p78
      $region18: #{conv_trans_block_forward.3} parent=11 // pred_check_branch
        %145 = sbr.rel (%p143) target = $region20
      $region19: #{conv_trans_block_forward.3} parent=11 // pred_region
        _
      $region20: #{conv_trans_block_forward.3} parent=11 // pred_fallthru
        _
      // Predicated region
      $region21: #{conv_trans_block_forward.3} parent=11 // pred_check
        %p146 = pneg %p99
      $region22: #{conv_trans_block_forward.3} parent=11 // pred_check_branch
        %148 = sbr.rel (%p146) target = $region24
      $region23: #{conv_trans_block_forward.3} parent=11 // pred_region
        _
      $region24: #{conv_trans_block_forward.3} parent=11 // pred_fallthru
        _
    $region12: #{conv_trans_block_forward.3} parent=5 // pred_fallthru
      _
    %p149 = scmp.lt.s32.totalorder %s10, 2
    // Predicated region
    $region25: #{conv_trans_block_forward.3} parent=5 // pred_check
      %p150 = pneg %p149
    $region26: #{conv_trans_block_forward.3} parent=5 // pred_check_branch
      %152 = sbr.rel (%p150) target = $region28
    $region27: #{conv_trans_block_forward.3} parent=5 // pred_region
      // Predicated region
      $region29: #{conv_trans_block_forward.3} parent=27 // pred_check
        %p153 = pneg %p30
      $region30: #{conv_trans_block_forward.3} parent=27 // pred_check_branch
        %155 = sbr.rel (%p153) target = $region32
      $region31: #{conv_trans_block_forward.3} parent=27 // pred_region
        %s156 = smul.u32 32, %s10
        %p157 = scmp.lt.s32.totalorder %s156, 63
        %s158 = scalar_select %p157, %s156, 63
        %s159 = smul.addr %s158, 4
        %s160 = scalar_lea.vmem %s0, %s159
        %s161 = smul.u32 32, %s10
      $region32: #{conv_trans_block_forward.3} parent=27 // pred_fallthru
        _
    $region28: #{conv_trans_block_forward.3} parent=5 // pred_fallthru
      _
    %p162 = scmp.le.s32.totalorder 1, %s10
    %p163 = scmp.lt.s32.totalorder %s10, 3
    %p164 = pnand %p162, %p163
    %p165 = pneg %p164
    // Predicated region
    $region33: #{conv_trans_block_forward.3} parent=5 // pred_check
      _
    $region34: #{conv_trans_block_forward.3} parent=5 // pred_check_branch
      %167 = sbr.rel (%p164) target = $region36
    $region35: #{conv_trans_block_forward.3} parent=5 // pred_region
      %s168 = ssub.s32 %s10, 1
      %s169 = smul.u32 32, %s15
      %p170 = scmp.lt.s32.totalorder %s169, 63
      %s171 = scalar_select %p170, %s169, 63
      %s172 = smul.addr %s171, 4
      %s173 = scalar_lea.vmem %s0, %s172
      %p174 = pneg %p36
      %p175 = pneg %p33
      %p176 = pneg %p57
      %p177 = pneg %p54
      %p178 = pneg %p78
      %p179 = pneg %p75
      %p180 = pneg %p99
      %p181 = pneg %p96
      %p182 = pneg %p125
      %p183 = pneg %p122
      %s184 = smul.u32 32, %s15
      %p185 = scmp.lt.s32.totalorder %s184, 63
      %s186 = scalar_select %p185, %s184, 63
      %s187 = smul.addr %s186, 4
      %s188 = scalar_lea.vmem %s4, %s187
      %s189 = smul.u32 32, %s15
      %p190 = scmp.lt.s32.totalorder %s189, 63
      %s191 = scalar_select %p190, %s189, 63
      %s192 = smul.addr %s191, 4
      %s193 = scalar_lea.vmem %s0, %s192
      %s194 = smul.u32 32, %s15
      %s195 = smul.u32 32, %s15
      %p196 = scmp.lt.s32.totalorder %s195, 63
      %s197 = scalar_select %p196, %s195, 63
      %s198 = smul.addr %s197, 4
      %s199 = scalar_lea.vmem %s4, %s198
      %s200 = smul.u32 32, %s15
      %v201 = vld [vmem:[%s193] sm:$0xf]
      %v202 = vld [vmem:[%s193 + $0x4] sm:$0xf]
      %v203 = vld [vmem:[%s193 + $0x8] sm:$0xf]
      %v204 = vld [vmem:[%s193 + $0xc] sm:$0xf]
      %v205 = vld [vmem:[%s193 + $0x10] sm:$0xf]
      %v206 = vld [vmem:[%s193 + $0x14] sm:$0xf]
      %v207 = vld [vmem:[%s193 + $0x18] sm:$0xf]
      %v208 = vld [vmem:[%s193 + $0x1c] sm:$0xf]
      %v209 = vld [vmem:[%s193 + $0x20] sm:$0xf]
      %v210 = vld [vmem:[%s193 + $0x24] sm:$0xf]
      %v211 = vld [vmem:[%s193 + $0x28] sm:$0xf]
      %v212 = vld [vmem:[%s193 + $0x2c] sm:$0xf]
      %v213 = vld [vmem:[%s193 + $0x30] sm:$0xf]
      %v214 = vld [vmem:[%s193 + $0x34] sm:$0xf]
      %v215 = vld [vmem:[%s193 + $0x38] sm:$0xf]
      %v216 = vld [vmem:[%s193 + $0x3c] sm:$0xf]
      %v217 = vld [vmem:[%s193 + $0x40] sm:$0xf]
      %v218 = vld [vmem:[%s193 + $0x44] sm:$0xf]
      %v219 = vld [vmem:[%s193 + $0x48] sm:$0xf]
      %v220 = vld [vmem:[%s193 + $0x4c] sm:$0xf]
      %v221 = vld [vmem:[%s193 + $0x50] sm:$0xf]
      %v222 = vld [vmem:[%s193 + $0x54] sm:$0xf]
      %v223 = vld [vmem:[%s193 + $0x58] sm:$0xf]
      %v224 = vld [vmem:[%s193 + $0x5c] sm:$0xf]
      %v225 = vld [vmem:[%s193 + $0x60] sm:$0xf]
      %v226 = vld [vmem:[%s193 + $0x64] sm:$0xf]
      %v227 = vld [vmem:[%s193 + $0x68] sm:$0xf]
      %v228 = vld [vmem:[%s193 + $0x6c] sm:$0xf]
      %v229 = vld [vmem:[%s193 + $0x70] sm:$0xf]
      %v230 = vld [vmem:[%s193 + $0x74] sm:$0xf]
      %v231 = vld [vmem:[%s193 + $0x78] sm:$0xf]
      %v232 = vld [vmem:[%s193 + $0x7c] sm:$0xf]
      %v233 = vld [vmem:[%s1] sm:$0xf]
      %v234 = vld [vmem:[%s1 + $0x4] sm:$0xf]
      %v235 = vld [vmem:[%s1 + $0x8] sm:$0xf]
      %v236 = vld [vmem:[%s1 + $0xc] sm:$0xf]
      %v237 = vld [vmem:[%s1 + $0x10] sm:$0xf]
      %v238 = vld [vmem:[%s1 + $0x14] sm:$0xf]
      %v239 = vld [vmem:[%s1 + $0x18] sm:$0xf]
      %v240 = vld [vmem:[%s1 + $0x1c] sm:$0xf]
      %v241 = vld [vmem:[%s1 + $0x20] sm:$0xf]
      %v242 = vld [vmem:[%s1 + $0x24] sm:$0xf]
      %v243 = vld [vmem:[%s1 + $0x28] sm:$0xf]
      %v244 = vld [vmem:[%s1 + $0x2c] sm:$0xf]
      %v245 = vld [vmem:[%s1 + $0x30] sm:$0xf]
      %v246 = vld [vmem:[%s1 + $0x34] sm:$0xf]
      %v247 = vld [vmem:[%s1 + $0x38] sm:$0xf]
      %v248 = vld [vmem:[%s1 + $0x3c] sm:$0xf]
      %v281 = vunpack.c.l.b16 %v201
      %v282 = vunpack.c.l.b16 %v202
      %v283 = vunpack.c.l.b16 %v203
      %v284 = vunpack.c.l.b16 %v204
      %v285 = vunpack.c.l.b16 %v205
      %v286 = vunpack.c.l.b16 %v206
      %v287 = vunpack.c.l.b16 %v207
      %v288 = vunpack.c.l.b16 %v208
      %v289 = vunpack.c.l.b16 %v209
      %v290 = vunpack.c.l.b16 %v210
      %v291 = vunpack.c.l.b16 %v211
      %v292 = vunpack.c.l.b16 %v212
      %v293 = vunpack.c.l.b16 %v213
      %v294 = vunpack.c.l.b16 %v214
      %v295 = vunpack.c.l.b16 %v215
      %v296 = vunpack.c.l.b16 %v216
      %v297 = vunpack.c.l.b16 %v217
      %v298 = vunpack.c.l.b16 %v218
      %v299 = vunpack.c.l.b16 %v219
      %v300 = vunpack.c.l.b16 %v220
      %v301 = vunpack.c.l.b16 %v221
      %v302 = vunpack.c.l.b16 %v222
      %v303 = vunpack.c.l.b16 %v223
      %v304 = vunpack.c.l.b16 %v224
      %v305 = vunpack.c.l.b16 %v225
      %v306 = vunpack.c.l.b16 %v226
      %v307 = vunpack.c.l.b16 %v227
      %v308 = vunpack.c.l.b16 %v228
      %v309 = vunpack.c.l.b16 %v229
      %v310 = vunpack.c.l.b16 %v230
      %v311 = vunpack.c.l.b16 %v231
      %v312 = vunpack.c.l.b16 %v232
      %v313 = vpack.c.b16 %v282, %v281
      %v314 = vpack.c.b16 %v284, %v283
      %v315 = vpack.c.b16 %v286, %v285
      %v316 = vpack.c.b16 %v288, %v287
      %v317 = vpack.c.b16 %v290, %v289
      %v318 = vpack.c.b16 %v292, %v291
      %v319 = vpack.c.b16 %v294, %v293
      %v320 = vpack.c.b16 %v296, %v295
      %v321 = vpack.c.b16 %v298, %v297
      %v322 = vpack.c.b16 %v300, %v299
      %v323 = vpack.c.b16 %v302, %v301
      %v324 = vpack.c.b16 %v304, %v303
      %v325 = vpack.c.b16 %v306, %v305
      %v326 = vpack.c.b16 %v308, %v307
      %v327 = vpack.c.b16 %v310, %v309
      %v328 = vpack.c.b16 %v312, %v311
      %v361 = vunpack.c.l.b16 %v233
      %v362 = vunpack.c.l.b16 %v234
      %v363 = vunpack.c.l.b16 %v235
      %v364 = vunpack.c.l.b16 %v236
      %v365 = vunpack.c.l.b16 %v237
      %v366 = vunpack.c.l.b16 %v238
      %v367 = vunpack.c.l.b16 %v239
      %v368 = vunpack.c.l.b16 %v240
      %v369 = vunpack.c.l.b16 %v241
      %v370 = vunpack.c.l.b16 %v242
      %v371 = vunpack.c.l.b16 %v243
      %v372 = vunpack.c.l.b16 %v244
      %v373 = vunpack.c.l.b16 %v245
      %v374 = vunpack.c.l.b16 %v246
      %v375 = vunpack.c.l.b16 %v247
      %v376 = vunpack.c.l.b16 %v248
      %v377 = vpack.c.b16 %v362, %v361
      %v378 = vpack.c.b16 %v364, %v363
      %v379 = vpack.c.b16 %v366, %v365
      %v380 = vpack.c.b16 %v368, %v367
      %v381 = vpack.c.b16 %v370, %v369
      %v382 = vpack.c.b16 %v372, %v371
      %v383 = vpack.c.b16 %v374, %v373
      %v384 = vpack.c.b16 %v376, %v375
      %393 = vmatpush.bf16.msra.mxu0 %v384
      %394 = vmatpush.bf16.msra.mxu0 %v383
      %395 = vmatpush.bf16.msra.mxu0 %v382
      %396 = vmatpush.bf16.msra.mxu0 %v381
      %397 = vmatpush.bf16.msra.mxu0 %v380
      %398 = vmatpush.bf16.msra.mxu0 %v379
      %399 = vmatpush.bf16.msra.mxu0 %v378
      %400 = vmatpush.bf16.msra.mxu0 %v377
      %401 = vmatmul.bf16.gmra.mxu0 %v313
      %v402 = vpop.f32.mrf.mxu0
      %v403 = vadd.f32 0.0, %v402
      %v404 = vpop.f32.mrf.mxu0
      %v405 = vadd.f32 0.0, %v404
      %406 = vmatmul.bf16.gmra.mxu0 %v314
      %v407 = vpop.f32.mrf.mxu0
      %v408 = vadd.f32 0.0, %v407
      %v409 = vpop.f32.mrf.mxu0
      %v410 = vadd.f32 0.0, %v409
      %411 = vmatmul.bf16.gmra.mxu0 %v315
      %v412 = vpop.f32.mrf.mxu0
      %v413 = vadd.f32 0.0, %v412
      %v414 = vpop.f32.mrf.mxu0
      %v415 = vadd.f32 0.0, %v414
      %416 = vmatmul.bf16.gmra.mxu0 %v316
      %v417 = vpop.f32.mrf.mxu0
      %v418 = vadd.f32 0.0, %v417
      %v419 = vpop.f32.mrf.mxu0
      %v420 = vadd.f32 0.0, %v419
      %421 = vmatmul.bf16.gmra.mxu0 %v317
      %v422 = vpop.f32.mrf.mxu0
      %v423 = vadd.f32 0.0, %v422
      %v424 = vpop.f32.mrf.mxu0
      %v425 = vadd.f32 0.0, %v424
      %426 = vmatmul.bf16.gmra.mxu0 %v318
      %v427 = vpop.f32.mrf.mxu0
      %v428 = vadd.f32 0.0, %v427
      %v429 = vpop.f32.mrf.mxu0
      %v430 = vadd.f32 0.0, %v429
      %431 = vmatmul.bf16.gmra.mxu0 %v319
      %v432 = vpop.f32.mrf.mxu0
      %v433 = vadd.f32 0.0, %v432
      %v434 = vpop.f32.mrf.mxu0
      %v435 = vadd.f32 0.0, %v434
      %436 = vmatmul.bf16.gmra.mxu0 %v320
      %v437 = vpop.f32.mrf.mxu0
      %v438 = vadd.f32 0.0, %v437
      %v439 = vpop.f32.mrf.mxu0
      %v440 = vadd.f32 0.0, %v439
      %441 = vmatmul.bf16.gmra.mxu0 %v321
      %v442 = vpop.f32.mrf.mxu0
      %v443 = vadd.f32 0.0, %v442
      %v444 = vpop.f32.mrf.mxu0
      %v445 = vadd.f32 0.0, %v444
      %446 = vmatmul.bf16.gmra.mxu0 %v322
      %v447 = vpop.f32.mrf.mxu0
      %v448 = vadd.f32 0.0, %v447
      %v449 = vpop.f32.mrf.mxu0
      %v450 = vadd.f32 0.0, %v449
      %451 = vmatmul.bf16.gmra.mxu0 %v323
      %v452 = vpop.f32.mrf.mxu0
      %v453 = vadd.f32 0.0, %v452
      %v454 = vpop.f32.mrf.mxu0
      %v455 = vadd.f32 0.0, %v454
      %456 = vmatmul.bf16.gmra.mxu0 %v324
      %v457 = vpop.f32.mrf.mxu0
      %v458 = vadd.f32 0.0, %v457
      %v459 = vpop.f32.mrf.mxu0
      %v460 = vadd.f32 0.0, %v459
      %461 = vmatmul.bf16.gmra.mxu0 %v325
      %v462 = vpop.f32.mrf.mxu0
      %v463 = vadd.f32 0.0, %v462
      %v464 = vpop.f32.mrf.mxu0
      %v465 = vadd.f32 0.0, %v464
      %466 = vmatmul.bf16.gmra.mxu0 %v326
      %v467 = vpop.f32.mrf.mxu0
      %v468 = vadd.f32 0.0, %v467
      %v469 = vpop.f32.mrf.mxu0
      %v470 = vadd.f32 0.0, %v469
      %471 = vmatmul.bf16.gmra.mxu0 %v327
      %v472 = vpop.f32.mrf.mxu0
      %v473 = vadd.f32 0.0, %v472
      %v474 = vpop.f32.mrf.mxu0
      %v475 = vadd.f32 0.0, %v474
      %476 = vmatmul.bf16.gmra.mxu0 %v328
      %v477 = vpop.f32.mrf.mxu0
      %v478 = vadd.f32 0.0, %v477
      %v479 = vpop.f32.mrf.mxu0
      %v480 = vadd.f32 0.0, %v479
      %481 = vdwg.mxu0
      %v482 = vld [vmem:[%s2] sm:$0x1]
      %v484 = vperm.slane %v482, 0
      %v486 = vmul.f32 %v403, %v484
      %v487 = vmul.f32 %v405, %v484
      %v488 = vmul.f32 %v408, %v484
      %v489 = vmul.f32 %v410, %v484
      %v490 = vmul.f32 %v413, %v484
      %v491 = vmul.f32 %v415, %v484
      %v492 = vmul.f32 %v418, %v484
      %v493 = vmul.f32 %v420, %v484
      %v494 = vmul.f32 %v423, %v484
      %v495 = vmul.f32 %v425, %v484
      %v496 = vmul.f32 %v428, %v484
      %v497 = vmul.f32 %v430, %v484
      %v498 = vmul.f32 %v433, %v484
      %v499 = vmul.f32 %v435, %v484
      %v500 = vmul.f32 %v438, %v484
      %v501 = vmul.f32 %v440, %v484
      %v502 = vmul.f32 %v443, %v484
      %v503 = vmul.f32 %v445, %v484
      %v504 = vmul.f32 %v448, %v484
      %v505 = vmul.f32 %v450, %v484
      %v506 = vmul.f32 %v453, %v484
      %v507 = vmul.f32 %v455, %v484
      %v508 = vmul.f32 %v458, %v484
      %v509 = vmul.f32 %v460, %v484
      %v510 = vmul.f32 %v463, %v484
      %v511 = vmul.f32 %v465, %v484
      %v512 = vmul.f32 %v468, %v484
      %v513 = vmul.f32 %v470, %v484
      %v514 = vmul.f32 %v473, %v484
      %v515 = vmul.f32 %v475, %v484
      %v516 = vmul.f32 %v478, %v484
      %v517 = vmul.f32 %v480, %v484
      %v518 = vld [vmem:[%s3] sm:$0x1]
      %v520 = vperm.slane %v518, 0
      %v522 = vadd.f32 %v486, %v520
      %v523 = vadd.f32 %v487, %v520
      %v524 = vadd.f32 %v488, %v520
      %v525 = vadd.f32 %v489, %v520
      %v526 = vadd.f32 %v490, %v520
      %v527 = vadd.f32 %v491, %v520
      %v528 = vadd.f32 %v492, %v520
      %v529 = vadd.f32 %v493, %v520
      %v530 = vadd.f32 %v494, %v520
      %v531 = vadd.f32 %v495, %v520
      %v532 = vadd.f32 %v496, %v520
      %v533 = vadd.f32 %v497, %v520
      %v534 = vadd.f32 %v498, %v520
      %v535 = vadd.f32 %v499, %v520
      %v536 = vadd.f32 %v500, %v520
      %v537 = vadd.f32 %v501, %v520
      %v538 = vadd.f32 %v502, %v520
      %v539 = vadd.f32 %v503, %v520
      %v540 = vadd.f32 %v504, %v520
      %v541 = vadd.f32 %v505, %v520
      %v542 = vadd.f32 %v506, %v520
      %v543 = vadd.f32 %v507, %v520
      %v544 = vadd.f32 %v508, %v520
      %v545 = vadd.f32 %v509, %v520
      %v546 = vadd.f32 %v510, %v520
      %v547 = vadd.f32 %v511, %v520
      %v548 = vadd.f32 %v512, %v520
      %v549 = vadd.f32 %v513, %v520
      %v550 = vadd.f32 %v514, %v520
      %v551 = vadd.f32 %v515, %v520
      %v552 = vadd.f32 %v516, %v520
      %v553 = vadd.f32 %v517, %v520
      %vm554 = vcmp.ge.f32.partialorder %v522, 0.0
      %vm555 = vcmp.ge.f32.partialorder %v523, 0.0
      %vm556 = vcmp.ge.f32.partialorder %v524, 0.0
      %vm557 = vcmp.ge.f32.partialorder %v525, 0.0
      %vm558 = vcmp.ge.f32.partialorder %v526, 0.0
      %vm559 = vcmp.ge.f32.partialorder %v527, 0.0
      %vm560 = vcmp.ge.f32.partialorder %v528, 0.0
      %vm561 = vcmp.ge.f32.partialorder %v529, 0.0
      %vm562 = vcmp.ge.f32.partialorder %v530, 0.0
      %vm563 = vcmp.ge.f32.partialorder %v531, 0.0
      %vm564 = vcmp.ge.f32.partialorder %v532, 0.0
      %vm565 = vcmp.ge.f32.partialorder %v533, 0.0
      %vm566 = vcmp.ge.f32.partialorder %v534, 0.0
      %vm567 = vcmp.ge.f32.partialorder %v535, 0.0
      %vm568 = vcmp.ge.f32.partialorder %v536, 0.0
      %vm569 = vcmp.ge.f32.partialorder %v537, 0.0
      %vm570 = vcmp.ge.f32.partialorder %v538, 0.0
      %vm571 = vcmp.ge.f32.partialorder %v539, 0.0
      %vm572 = vcmp.ge.f32.partialorder %v540, 0.0
      %vm573 = vcmp.ge.f32.partialorder %v541, 0.0
      %vm574 = vcmp.ge.f32.partialorder %v542, 0.0
      %vm575 = vcmp.ge.f32.partialorder %v543, 0.0
      %vm576 = vcmp.ge.f32.partialorder %v544, 0.0
      %vm577 = vcmp.ge.f32.partialorder %v545, 0.0
      %vm578 = vcmp.ge.f32.partialorder %v546, 0.0
      %vm579 = vcmp.ge.f32.partialorder %v547, 0.0
      %vm580 = vcmp.ge.f32.partialorder %v548, 0.0
      %vm581 = vcmp.ge.f32.partialorder %v549, 0.0
      %vm582 = vcmp.ge.f32.partialorder %v550, 0.0
      %vm583 = vcmp.ge.f32.partialorder %v551, 0.0
      %vm584 = vcmp.ge.f32.partialorder %v552, 0.0
      %vm585 = vcmp.ge.f32.partialorder %v553, 0.0
      %v586 = vmul.f32 %v522, 0.1
      %v587 = vmul.f32 %v523, 0.1
      %v588 = vmul.f32 %v524, 0.1
      %v589 = vmul.f32 %v525, 0.1
      %v590 = vmul.f32 %v526, 0.1
      %v591 = vmul.f32 %v527, 0.1
      %v592 = vmul.f32 %v528, 0.1
      %v593 = vmul.f32 %v529, 0.1
      %v594 = vmul.f32 %v530, 0.1
      %v595 = vmul.f32 %v531, 0.1
      %v596 = vmul.f32 %v532, 0.1
      %v597 = vmul.f32 %v533, 0.1
      %v598 = vmul.f32 %v534, 0.1
      %v599 = vmul.f32 %v535, 0.1
      %v600 = vmul.f32 %v536, 0.1
      %v601 = vmul.f32 %v537, 0.1
      %v602 = vmul.f32 %v538, 0.1
      %v603 = vmul.f32 %v539, 0.1
      %v604 = vmul.f32 %v540, 0.1
      %v605 = vmul.f32 %v541, 0.1
      %v606 = vmul.f32 %v542, 0.1
      %v607 = vmul.f32 %v543, 0.1
      %v608 = vmul.f32 %v544, 0.1
      %v609 = vmul.f32 %v545, 0.1
      %v610 = vmul.f32 %v546, 0.1
      %v611 = vmul.f32 %v547, 0.1
      %v612 = vmul.f32 %v548, 0.1
      %v613 = vmul.f32 %v549, 0.1
      %v614 = vmul.f32 %v550, 0.1
      %v615 = vmul.f32 %v551, 0.1
      %v616 = vmul.f32 %v552, 0.1
      %v617 = vmul.f32 %v553, 0.1
      %v618 = vsel %vm554, %v522, %v586
      %v619 = vsel %vm555, %v523, %v587
      %v620 = vsel %vm556, %v524, %v588
      %v621 = vsel %vm557, %v525, %v589
      %v622 = vsel %vm558, %v526, %v590
      %v623 = vsel %vm559, %v527, %v591
      %v624 = vsel %vm560, %v528, %v592
      %v625 = vsel %vm561, %v529, %v593
      %v626 = vsel %vm562, %v530, %v594
      %v627 = vsel %vm563, %v531, %v595
      %v628 = vsel %vm564, %v532, %v596
      %v629 = vsel %vm565, %v533, %v597
      %v630 = vsel %vm566, %v534, %v598
      %v631 = vsel %vm567, %v535, %v599
      %v632 = vsel %vm568, %v536, %v600
      %v633 = vsel %vm569, %v537, %v601
      %v634 = vsel %vm570, %v538, %v602
      %v635 = vsel %vm571, %v539, %v603
      %v636 = vsel %vm572, %v540, %v604
      %v637 = vsel %vm573, %v541, %v605
      %v638 = vsel %vm574, %v542, %v606
      %v639 = vsel %vm575, %v543, %v607
      %v640 = vsel %vm576, %v544, %v608
      %v641 = vsel %vm577, %v545, %v609
      %v642 = vsel %vm578, %v546, %v610
      %v643 = vsel %vm579, %v547, %v611
      %v644 = vsel %vm580, %v548, %v612
      %v645 = vsel %vm581, %v549, %v613
      %v646 = vsel %vm582, %v550, %v614
      %v647 = vsel %vm583, %v551, %v615
      %v648 = vsel %vm584, %v552, %v616
      %v649 = vsel %vm585, %v553, %v617
      %v650 = vpack.c.bf16 %v618, %v618
      %v651 = vpack.c.bf16 %v619, %v619
      %v652 = vpack.c.bf16 %v620, %v620
      %v653 = vpack.c.bf16 %v621, %v621
      %v654 = vpack.c.bf16 %v622, %v622
      %v655 = vpack.c.bf16 %v623, %v623
      %v656 = vpack.c.bf16 %v624, %v624
      %v657 = vpack.c.bf16 %v625, %v625
      %v658 = vpack.c.bf16 %v626, %v626
      %v659 = vpack.c.bf16 %v627, %v627
      %v660 = vpack.c.bf16 %v628, %v628
      %v661 = vpack.c.bf16 %v629, %v629
      %v662 = vpack.c.bf16 %v630, %v630
      %v663 = vpack.c.bf16 %v631, %v631
      %v664 = vpack.c.bf16 %v632, %v632
      %v665 = vpack.c.bf16 %v633, %v633
      %v666 = vpack.c.bf16 %v634, %v634
      %v667 = vpack.c.bf16 %v635, %v635
      %v668 = vpack.c.bf16 %v636, %v636
      %v669 = vpack.c.bf16 %v637, %v637
      %v670 = vpack.c.bf16 %v638, %v638
      %v671 = vpack.c.bf16 %v639, %v639
      %v672 = vpack.c.bf16 %v640, %v640
      %v673 = vpack.c.bf16 %v641, %v641
      %v674 = vpack.c.bf16 %v642, %v642
      %v675 = vpack.c.bf16 %v643, %v643
      %v676 = vpack.c.bf16 %v644, %v644
      %v677 = vpack.c.bf16 %v645, %v645
      %v678 = vpack.c.bf16 %v646, %v646
      %v679 = vpack.c.bf16 %v647, %v647
      %v680 = vpack.c.bf16 %v648, %v648
      %v681 = vpack.c.bf16 %v649, %v649
      %682 = vst [vmem:[%s199] sm:$0xf] %v650
      %683 = vst [vmem:[%s199 + $0x4] sm:$0xf] %v651
      %684 = vst [vmem:[%s199 + $0x8] sm:$0xf] %v652
      %685 = vst [vmem:[%s199 + $0xc] sm:$0xf] %v653
      %686 = vst [vmem:[%s199 + $0x10] sm:$0xf] %v654
      %687 = vst [vmem:[%s199 + $0x14] sm:$0xf] %v655
      %688 = vst [vmem:[%s199 + $0x18] sm:$0xf] %v656
      %689 = vst [vmem:[%s199 + $0x1c] sm:$0xf] %v657
      %690 = vst [vmem:[%s199 + $0x20] sm:$0xf] %v658
      %691 = vst [vmem:[%s199 + $0x24] sm:$0xf] %v659
      %692 = vst [vmem:[%s199 + $0x28] sm:$0xf] %v660
      %693 = vst [vmem:[%s199 + $0x2c] sm:$0xf] %v661
      %694 = vst [vmem:[%s199 + $0x30] sm:$0xf] %v662
      %695 = vst [vmem:[%s199 + $0x34] sm:$0xf] %v663
      %696 = vst [vmem:[%s199 + $0x38] sm:$0xf] %v664
      %697 = vst [vmem:[%s199 + $0x3c] sm:$0xf] %v665
      %698 = vst [vmem:[%s199 + $0x40] sm:$0xf] %v666
      %699 = vst [vmem:[%s199 + $0x44] sm:$0xf] %v667
      %700 = vst [vmem:[%s199 + $0x48] sm:$0xf] %v668
      %701 = vst [vmem:[%s199 + $0x4c] sm:$0xf] %v669
      %702 = vst [vmem:[%s199 + $0x50] sm:$0xf] %v670
      %703 = vst [vmem:[%s199 + $0x54] sm:$0xf] %v671
      %704 = vst [vmem:[%s199 + $0x58] sm:$0xf] %v672
      %705 = vst [vmem:[%s199 + $0x5c] sm:$0xf] %v673
      %706 = vst [vmem:[%s199 + $0x60] sm:$0xf] %v674
      %707 = vst [vmem:[%s199 + $0x64] sm:$0xf] %v675
      %708 = vst [vmem:[%s199 + $0x68] sm:$0xf] %v676
      %709 = vst [vmem:[%s199 + $0x6c] sm:$0xf] %v677
      %710 = vst [vmem:[%s199 + $0x70] sm:$0xf] %v678
      %711 = vst [vmem:[%s199 + $0x74] sm:$0xf] %v679
      %712 = vst [vmem:[%s199 + $0x78] sm:$0xf] %v680
      %713 = vst [vmem:[%s199 + $0x7c] sm:$0xf] %v681
      %s714 = smul.u32 32, %s15
      %p715 = scmp.lt.s32.totalorder %s714, 63
      %s716 = scalar_select %p715, %s714, 63
      %s717 = smul.addr %s716, 4
      %s718 = scalar_lea.vmem %s4, %s717
      // Predicated region
      $region37: #{conv_trans_block_forward.3} parent=35 // pred_check
        %p719 = pneg %p122
      $region38: #{conv_trans_block_forward.3} parent=35 // pred_check_branch
        %721 = sbr.rel (%p719) target = $region40
      $region39: #{conv_trans_block_forward.3} parent=35 // pred_region
        %s722 = smul.u32 32, %s15
      $region40: #{conv_trans_block_forward.3} parent=35 // pred_fallthru
        _
    $region36: #{conv_trans_block_forward.3} parent=5 // pred_fallthru
      _
    %p723 = scmp.le.s32.totalorder 2, %s10
    // Predicated region
    $region41: #{conv_trans_block_forward.3} parent=5 // pred_check
      %p724 = pneg %p723
    $region42: #{conv_trans_block_forward.3} parent=5 // pred_check_branch
      %726 = sbr.rel (%p724) target = $region44
    $region43: #{conv_trans_block_forward.3} parent=5 // pred_region
      %s727 = ssub.s32 %s10, 2
      // Predicated region
      $region45: #{conv_trans_block_forward.3} parent=43 // pred_check
        %p728 = pneg %p128
      $region46: #{conv_trans_block_forward.3} parent=43 // pred_check_branch
        %730 = sbr.rel (%p728) target = $region48
      $region47: #{conv_trans_block_forward.3} parent=43 // pred_region
        %s731 = smul.u32 32, %s16
        %p732 = scmp.lt.s32.totalorder %s731, 63
        %s733 = scalar_select %p732, %s731, 63
        %s734 = smul.addr %s733, 4
        %s735 = scalar_lea.vmem %s4, %s734
      $region48: #{conv_trans_block_forward.3} parent=43 // pred_fallthru
        _
    $region44: #{conv_trans_block_forward.3} parent=5 // pred_fallthru
      _
  $region6: #{conv_trans_block_forward.3} parent=0 // loop_footer
    %s14 = sadd.s32 1, %s10
  $region7: #{conv_trans_block_forward.3} parent=0 // loop_footer_branch
    %9 = sbr.rel target = $region3
  $region8: #{conv_trans_block_forward.3} parent=0 // loop_exit
    _

</llo_original>
